<compile_context>
chip_gen: v7x
topology: tpu7x:2x2x1
jax: 0.10.0
libtpu: 0.0.40
codegen_flags: <defaults>
</compile_context>

<pallas_src>
from functools import partial

import jax
import jax.numpy as jnp
from jax.experimental import pallas as pl
from jax.experimental.pallas import tpu as pltpu


# ----------------------------------------------------------------------------
# Single-step kernel: two f32-accumulated MXU dots + fused gate math.
# ----------------------------------------------------------------------------
def _onlstm_cell_kernel(x_ref, hx_ref, cx_ref, wih_ref, whh_ref, b_ref,
                        hy_ref, cy_ref):
    H = hy_ref.shape[-1]
    mm_dtype = wih_ref.dtype

    gates = (jnp.dot(x_ref[...].astype(mm_dtype), wih_ref[...],
                     preferred_element_type=jnp.float32)
             + jnp.dot(hx_ref[...].astype(mm_dtype), whh_ref[...],
                       preferred_element_type=jnp.float32)
             + b_ref[...])

    # Chunk order: [out | cell | in | forget].
    out_g = jax.nn.sigmoid(gates[:, 0:H])
    cell_g = jnp.tanh(gates[:, H:2 * H])                 # tanh on cell chunk only
    if_g = jax.nn.sigmoid(gates[:, 2 * H:4 * H])         # [in | forget] in one push
    in_g = if_g[:, 0:H]
    forget_g = if_g[:, H:2 * H]

    cy = forget_g * cx_ref[...] + in_g * cell_g
    hy = out_g * jnp.tanh(cy)

    hy_ref[...] = hy.astype(hy_ref.dtype)
    cy_ref[...] = cy.astype(cy_ref.dtype)


# ----------------------------------------------------------------------------
# Sequence-fused kernel: grid=(B//TB, T//TT); TT cell steps per grid iteration.
# The recurrence-independent x-projection is precomputed (gx = xs@W_ih.T + b);
# only hx @ W_hh.T stays inside the loop. W_hh.T is VMEM-resident; state is
# carried in fori_loop values and persisted in VMEM scratch across time blocks.
# ----------------------------------------------------------------------------
def _onlstm_seq_kernel(gx_ref, h0_ref, c0_ref, whh_ref, hy_ref, cy_ref,
                       h_scr, c_scr):
    H = h_scr.shape[-1]
    TT = gx_ref.shape[0]
    t_blk = pl.program_id(1)
    mm_dtype = whh_ref.dtype

    @pl.when(t_blk == 0)
    def _():
        h_scr[...] = h0_ref[...]
        c_scr[...] = c0_ref[...]

    def step(tt, carry):
        h, c = carry
        gates = gx_ref[tt] + jnp.dot(h.astype(mm_dtype), whh_ref[...],
                                     preferred_element_type=jnp.float32)
        out_g = jax.nn.sigmoid(gates[:, 0:H])
        cell_g = jnp.tanh(gates[:, H:2 * H])             # tanh on cell chunk only
        if_g = jax.nn.sigmoid(gates[:, 2 * H:4 * H])
        cy = if_g[:, H:2 * H] * c + if_g[:, 0:H] * cell_g
        hy = out_g * jnp.tanh(cy)
        hy_ref[tt] = hy.astype(hy_ref.dtype)
        return hy, cy

    h_fin, c_fin = jax.lax.fori_loop(0, TT, step, (h_scr[...], c_scr[...]),
                                     unroll=True)
    h_scr[...] = h_fin
    c_scr[...] = c_fin

    # Only the last time block stores the final cell state (single vst stream).
    @pl.when(t_blk == pl.num_programs(1) - 1)
    def _():
        cy_ref[...] = c_fin.astype(cy_ref.dtype)


# ----------------------------------------------------------------------------
# Parameter preprocessing (one-time, NOT per call).
# ----------------------------------------------------------------------------
def prepare_onlstm_params(w_ih, b_ih, w_hh, b_hh, dropconnect=0.0,
                          matmul_dtype=jnp.bfloat16):
    """w_ih: (4H, IN), w_hh: (4H, H) torch layout; b_*: (4H,).

    Returns:
      w_ih_t: (IN, 4H) matmul_dtype
      w_hh_t: (H, 4H)  matmul_dtype, already scaled by (1 - dropconnect) (eval mode)
      bias:   (1, 4H)  f32 = b_ih + b_hh
    """
    w_ih_t = jnp.asarray(w_ih, jnp.float32).T.astype(matmul_dtype)
    w_hh_t = (jnp.asarray(w_hh, jnp.float32) * (1.0 - dropconnect)).T.astype(matmul_dtype)
    bias = (jnp.asarray(b_ih, jnp.float32)
            + jnp.asarray(b_hh, jnp.float32)).reshape(1, -1)
    return w_ih_t, w_hh_t, bias


def _pick_time_block(T, want):
    want = max(1, min(want, T))
    for tt in range(want, 0, -1):
        if T % tt == 0:
            return tt
    return 1


def _pick_batch_block(B, want):
    if B % 8 != 0:
        return B                       # must equal full dim if not 8-aligned
    tb = max(8, (min(want, B) // 8) * 8)
    while B % tb != 0:
        tb -= 8
    return max(tb, 8)


def _vmem_limit_bytes(estimate):
    return int(min(48 << 20, max(16 << 20, 2 * estimate)))


# ----------------------------------------------------------------------------
# Wrappers
# ----------------------------------------------------------------------------
@jax.jit
def onlstm_cell_forward(x, hx, cx, w_ih_t, w_hh_t, bias):
    """Single PLAIN_ONLSTMCell step (module .forward semantics, eval mode)."""
    B, IN = x.shape
    H = hx.shape[-1]
    G = 4 * H
    mm_itemsize = jnp.dtype(w_ih_t.dtype).itemsize

    vmem = pl.BlockSpec(memory_space=pltpu.MemorySpace.VMEM)
    bytes_est = ((IN + H) * G * mm_itemsize          # weights
                 + B * (IN + 2 * H) * 4 + G * 4      # x, hx, cx, bias
                 + 2 * B * H * 4)                    # hy, cy
    cost = pl.CostEstimate(
        flops=int(2 * B * (IN + H) * G),
        transcendentals=int(5 * B * H),
        bytes_accessed=int(bytes_est),
    )

    hy, cy = pl.pallas_call(
        _onlstm_cell_kernel,
        out_shape=(jax.ShapeDtypeStruct((B, H), jnp.float32),
                   jax.ShapeDtypeStruct((B, H), jnp.float32)),
        in_specs=[vmem] * 6,
        out_specs=(vmem, vmem),
        compiler_params=pltpu.CompilerParams(
            vmem_limit_bytes=_vmem_limit_bytes(bytes_est)),
        cost_estimate=cost,
    )(x.astype(jnp.float32), hx.astype(jnp.float32), cx.astype(jnp.float32),
      w_ih_t, w_hh_t, bias)
    return hy.reshape(-1, H), cy


@partial(jax.jit, static_argnames=("time_block", "batch_block", "out_dtype"))
def onlstm_sequence_forward(xs, h0, c0, w_ih_t, w_hh_t, bias,
                            time_block=4, batch_block=256,
                            out_dtype=jnp.float32):
    """T recurrent steps in one pallas_call.

    xs: (T, B, IN) f32. Returns hy_seq (T, B, H) and final cy (B, H).
    """
    T, B, IN = xs.shape
    H = h0.shape[-1]
    G = 4 * H
    mm_dtype = w_ih_t.dtype
    mm_itemsize = jnp.dtype(mm_dtype).itemsize
    out_itemsize = jnp.dtype(out_dtype).itemsize

    # Hoisted, recurrence-independent input projection: one big MXU matmul
    # (the x->bf16 cast is absorbed here), bias b_ih + b_hh folded in.
    gx = jnp.dot(xs.reshape(T * B, IN).astype(mm_dtype), w_ih_t,
                 preferred_element_type=jnp.float32)
    gx = gx.reshape(T, B, G) + bias

    TT = _pick_time_block(T, time_block)
    TB = _pick_batch_block(B, batch_block)
    n_t = T // TT
    n_b = B // TB

    # VMEM sizing: pipelined gx/hy blocks (x2 buffers) + resident weights/state.
    # TODO(synk): if the VMEM report shows the constant-index blocks (W_hh.T,
    # h0, c0, cy) double-buffered, add pipeline_mode=pl.Buffered(1) to them.
    vmem_est = (2 * (TT * TB * G * 4 + TT * TB * H * out_itemsize)
                + 2 * (H * G * mm_itemsize + 3 * TB * H * 4)
                + 2 * TB * H * 4)
    cost = pl.CostEstimate(
        flops=int(2 * T * B * H * G),
        transcendentals=int(5 * T * B * H),
        bytes_accessed=int(T * B * G * 4 + H * G * mm_itemsize
                           + 2 * B * H * 4 + T * B * H * out_itemsize
                           + B * H * 4),
    )

    hy_seq, cy_final = pl.pallas_call(
        _onlstm_seq_kernel,
        out_shape=(jax.ShapeDtypeStruct((T, B, H), out_dtype),
                   jax.ShapeDtypeStruct((B, H), jnp.float32)),
        grid=(n_b, n_t),
        in_specs=[
            pl.BlockSpec((TT, TB, G), lambda b, t: (t, b, 0)),   # gates_x stream
            pl.BlockSpec((TB, H), lambda b, t: (b, 0)),          # h0
            pl.BlockSpec((TB, H), lambda b, t: (b, 0)),          # c0
            pl.BlockSpec((H, G), lambda b, t: (0, 0)),           # W_hh.T resident
        ],
        out_specs=(
            pl.BlockSpec((TT, TB, H), lambda b, t: (t, b, 0)),   # hy per block
            pl.BlockSpec((TB, H), lambda b, t: (b, 0)),          # final cy
        ),
        scratch_shapes=[pltpu.VMEM((TB, H), jnp.float32),
                        pltpu.VMEM((TB, H), jnp.float32)],
        compiler_params=pltpu.CompilerParams(
            dimension_semantics=("parallel", "arbitrary"),       # batch x time
            vmem_limit_bytes=_vmem_limit_bytes(vmem_est)),
        cost_estimate=cost,
    )(gx, h0.astype(jnp.float32), c0.astype(jnp.float32), w_hh_t)
    return hy_seq, cy_final
    # TODO(synk): if H is not a multiple of 128, pad H (or pack (B,H) lane-major)
    # so the per-block hy store stays lane-dense instead of masked vst.msk.


# ----------------------------------------------------------------------------
# Pure-JAX references
# ----------------------------------------------------------------------------
def _reference_step_f32(x, hx, cx, w_ih, b_ih, w_hh, b_hh, dropconnect=0.0):
    """f32 reference mirroring the PyTorch module (eval mode)."""
    H = hx.shape[-1]
    gates = x @ w_ih.T + b_ih + hx @ (w_hh * (1.0 - dropconnect)).T + b_hh
    outgate = gates[:, 0 * H:1 * H]
    cell = gates[:, 1 * H:2 * H]
    ingate = gates[:, 2 * H:3 * H]
    forgetgate = gates[:, 3 * H:4 * H]
    cy = (jax.nn.sigmoid(forgetgate) * cx
          + jax.nn.sigmoid(ingate) * jnp.tanh(cell))
    hy = jax.nn.sigmoid(outgate) * jnp.tanh(cy)
    return hy.reshape(-1, H), cy


def _reference_step_mixed(x, hx, cx, w_ih_t, w_hh_t, bias):
    """Mirrors the kernel's bf16-operand / f32-accumulate math."""
    H = hx.shape[-1]
    gates = (jnp.dot(x.astype(w_ih_t.dtype), w_ih_t,
                     preferred_element_type=jnp.float32) + bias
             + jnp.dot(hx.astype(w_hh_t.dtype), w_hh_t,
                       preferred_element_type=jnp.float32))
    o = jax.nn.sigmoid(gates[:, 0:H])
    g = jnp.tanh(gates[:, H:2 * H])
    i = jax.nn.sigmoid(gates[:, 2 * H:3 * H])
    f = jax.nn.sigmoid(gates[:, 3 * H:4 * H])
    cy = f * cx + i * g
    hy = o * jnp.tanh(cy)
    return hy, cy


# TODO(synk): training-mode sampled DropConnect (per-weight bernoulli mask) and
# the unused modulation() helper are not implemented; eval semantics only.


if __name__ == "__main__":
    input_size = 32
    hidden_size = 128       # multiple of 128 -> lane-aligned gate slices & stores
    batch = 8
    seq_len = 12
    dropconnect = 0.1

    key = jax.random.PRNGKey(0)
    kx, kxs, khx, kcx, kwi, kbi, kwh, kbh = jax.random.split(key, 8)

    x = jax.random.normal(kx, (batch, input_size), jnp.float32)
    xs = jax.random.normal(kxs, (seq_len, batch, input_size), jnp.float32)
    hx = jax.random.normal(khx, (batch, hidden_size), jnp.float32)
    cx = jax.random.normal(kcx, (batch, hidden_size), jnp.float32)

    bound_ih = 1.0 / (input_size ** 0.5)
    bound_hh = 1.0 / (hidden_size ** 0.5)
    w_ih = jax.random.uniform(kwi, (4 * hidden_size, input_size), jnp.float32,
                              -bound_ih, bound_ih)
    b_ih = jax.random.uniform(kbi, (4 * hidden_size,), jnp.float32,
                              -bound_ih, bound_ih)
    w_hh = jax.random.uniform(kwh, (4 * hidden_size, hidden_size), jnp.float32,
                              -bound_hh, bound_hh)
    b_hh = jax.random.uniform(kbh, (4 * hidden_size,), jnp.float32,
                              -bound_hh, bound_hh)

    # One-time parameter preprocessing (transpose + (1-p) scale + bias fold).
    w_ih_t, w_hh_t, bias = prepare_onlstm_params(w_ih, b_ih, w_hh, b_hh,
                                                 dropconnect)

    # ---- single cell step (module forward semantics) ----
    hy, cy = onlstm_cell_forward(x, hx, cx, w_ih_t, w_hh_t, bias)
    hy, cy = jax.block_until_ready((hy, cy))

    hy_ref, cy_ref = _reference_step_f32(x, hx, cx, w_ih, b_ih, w_hh, b_hh,
                                         dropconnect)
    assert hy.shape == (batch, hidden_size) and cy.shape == (batch, hidden_size)
    # bf16 matmul operands => allow a few e-2 vs the pure-f32 reference.
    assert bool(jnp.allclose(hy, hy_ref, atol=3e-2, rtol=3e-2))
    assert bool(jnp.allclose(cy, cy_ref, atol=3e-2, rtol=3e-2))

    # ---- sequence-fused variant (T steps, time-blocked, hoisted x-projection) ----
    h0 = jnp.zeros((batch, hidden_size), jnp.float32)
    c0 = jnp.zeros((batch, hidden_size), jnp.float32)
    hy_seq, cy_fin = onlstm_sequence_forward(xs, h0, c0, w_ih_t, w_hh_t, bias,
                                             time_block=4)
    hy_seq, cy_fin = jax.block_until_ready((hy_seq, cy_fin))

    h_r, c_r = h0, c0
    hy_seq_ref = []
    for t in range(seq_len):
        h_r, c_r = _reference_step_mixed(xs[t], h_r, c_r, w_ih_t, w_hh_t, bias)
        hy_seq_ref.append(h_r)
    hy_seq_ref = jnp.stack(hy_seq_ref, axis=0)
    assert bool(jnp.allclose(hy_seq, hy_seq_ref, atol=1e-2, rtol=1e-2))
    assert bool(jnp.allclose(cy_fin, c_r, atol=1e-2, rtol=1e-2))

    print("KERNEL_OK")
</pallas_src>

<mosaic_0001>
module attributes {stable_mosaic.version = 11 : i64} {
  func.func @_onlstm_cell_kernel(%arg0: memref<8x32xf32, #tpu.memory_space<vmem>>, %arg1: memref<8x128xf32, #tpu.memory_space<vmem>>, %arg2: memref<8x128xf32, #tpu.memory_space<vmem>>, %arg3: memref<32x512xbf16, #tpu.memory_space<vmem>>, %arg4: memref<128x512xbf16, #tpu.memory_space<vmem>>, %arg5: memref<1x512xf32, #tpu.memory_space<vmem>>, %arg6: memref<8x128xf32, #tpu.memory_space<vmem>>, %arg7: memref<8x128xf32, #tpu.memory_space<vmem>>) attributes {dimension_semantics = [], scalar_prefetch = 0 : i64, scratch_operands = 0 : i64, tpu.core_type = #tpu.core_type<tc>} {
    %c0 = arith.constant 0 : index
    %c0_0 = arith.constant 0 : index
    %0 = vector.load %arg0[%c0, %c0_0] : memref<8x32xf32, #tpu.memory_space<vmem>>, vector<8x32xf32>
    %1 = arith.truncf %0 : vector<8x32xf32> to vector<8x32xbf16>
    %c0_1 = arith.constant 0 : index
    %c0_2 = arith.constant 0 : index
    %2 = vector.load %arg3[%c0_1, %c0_2] : memref<32x512xbf16, #tpu.memory_space<vmem>>, vector<32x512xbf16>
    %cst = arith.constant dense<0.000000e+00> : vector<8x512xf32>
    %3 = tpu.matmul %1, %2, %cst {dimension_numbers = #tpu.dot_dimension_numbers<[1], [0], [0], [1], [0, 0, 1, 1], [], []>} : vector<8x32xbf16>, vector<32x512xbf16>, vector<8x512xf32> -> vector<8x512xf32>
    %c0_3 = arith.constant 0 : index
    %c0_4 = arith.constant 0 : index
    %4 = vector.load %arg1[%c0_3, %c0_4] : memref<8x128xf32, #tpu.memory_space<vmem>>, vector<8x128xf32>
    %5 = arith.truncf %4 : vector<8x128xf32> to vector<8x128xbf16>
    %c0_5 = arith.constant 0 : index
    %c0_6 = arith.constant 0 : index
    %6 = vector.load %arg4[%c0_5, %c0_6] : memref<128x512xbf16, #tpu.memory_space<vmem>>, vector<128x512xbf16>
    %cst_7 = arith.constant dense<0.000000e+00> : vector<8x512xf32>
    %7 = tpu.matmul %5, %6, %cst_7 {dimension_numbers = #tpu.dot_dimension_numbers<[1], [0], [0], [1], [0, 0, 1, 1], [], []>} : vector<8x128xbf16>, vector<128x512xbf16>, vector<8x512xf32> -> vector<8x512xf32>
    %8 = arith.addf %3, %7 : vector<8x512xf32>
    %c0_8 = arith.constant 0 : index
    %c0_9 = arith.constant 0 : index
    %9 = vector.load %arg5[%c0_8, %c0_9] : memref<1x512xf32, #tpu.memory_space<vmem>>, vector<1x512xf32>
    %10 = vector.broadcast %9 : vector<1x512xf32> to vector<8x512xf32>
    %11 = arith.addf %8, %10 : vector<8x512xf32>
    %12 = vector.extract_strided_slice %11 {offsets = [0, 0], sizes = [8, 128], strides = [1, 1]} : vector<8x512xf32> to vector<8x128xf32>
    %13 = arith.negf %12 : vector<8x128xf32>
    %14 = math.exp %13 : vector<8x128xf32>
    %cst_10 = arith.constant 1.000000e+00 : f32
    %15 = vector.broadcast %cst_10 : f32 to vector<8x128xf32>
    %16 = arith.addf %15, %14 : vector<8x128xf32>
    %17 = arith.divf %15, %16 : vector<8x128xf32>
    %18 = vector.extract_strided_slice %11 {offsets = [0, 128], sizes = [8, 128], strides = [1, 1]} : vector<8x512xf32> to vector<8x128xf32>
    %19 = math.tanh %18 : vector<8x128xf32>
    %20 = vector.extract_strided_slice %11 {offsets = [0, 256], sizes = [8, 256], strides = [1, 1]} : vector<8x512xf32> to vector<8x256xf32>
    %21 = arith.negf %20 : vector<8x256xf32>
    %22 = math.exp %21 : vector<8x256xf32>
    %cst_11 = arith.constant 1.000000e+00 : f32
    %23 = vector.broadcast %cst_11 : f32 to vector<8x256xf32>
    %24 = arith.addf %23, %22 : vector<8x256xf32>
    %25 = arith.divf %23, %24 : vector<8x256xf32>
    %26 = vector.extract_strided_slice %25 {offsets = [0, 0], sizes = [8, 128], strides = [1, 1]} : vector<8x256xf32> to vector<8x128xf32>
    %27 = vector.extract_strided_slice %25 {offsets = [0, 128], sizes = [8, 128], strides = [1, 1]} : vector<8x256xf32> to vector<8x128xf32>
    %c0_12 = arith.constant 0 : index
    %c0_13 = arith.constant 0 : index
    %28 = vector.load %arg2[%c0_12, %c0_13] : memref<8x128xf32, #tpu.memory_space<vmem>>, vector<8x128xf32>
    %29 = arith.mulf %27, %28 : vector<8x128xf32>
    %30 = arith.mulf %26, %19 : vector<8x128xf32>
    %31 = arith.addf %29, %30 : vector<8x128xf32>
    %32 = math.tanh %31 : vector<8x128xf32>
    %33 = arith.mulf %17, %32 : vector<8x128xf32>
    %c0_14 = arith.constant 0 : index
    %c0_15 = arith.constant 0 : index
    %34 = vector.load %arg6[%c0_14, %c0_15] : memref<8x128xf32, #tpu.memory_space<vmem>>, vector<8x128xf32>
    tpu.vector_store %arg6[%c0_14, %c0_15], %33 {strides = array<i32>} : memref<8x128xf32, #tpu.memory_space<vmem>>, vector<8x128xf32>,
    %c0_16 = arith.constant 0 : index
    %c0_17 = arith.constant 0 : index
    %35 = vector.load %arg7[%c0_16, %c0_17] : memref<8x128xf32, #tpu.memory_space<vmem>>, vector<8x128xf32>
    tpu.vector_store %arg7[%c0_16, %c0_17], %31 {strides = array<i32>} : memref<8x128xf32, #tpu.memory_space<vmem>>, vector<8x128xf32>,
    return
  }
}

</mosaic_0001>

<llo_original>
// kernel: onlstm_cell_forward.1
$region0: #{onlstm_cell_forward.1}
  #allocation0 [shape = 'u32[]', space=smem, size = 0x4, offset = 0x4, fixed_abs, tag = 'smem constant byte address 0x4 - core index']
  #allocation1 [shape = 'u32[144,128]{1,0:T(1,128)}', space=vmem, size = 0x12000, scoped, tag = 'internal scratch']
  %s0 = inlined_call_operand.hbm [shape: f32[8,32], index: 0, kind: input, shape index: {}]
  %s1 = inlined_call_operand.hbm [shape: f32[8,128], index: 1, kind: input, shape index: {}]
  %s2 = inlined_call_operand.hbm [shape: f32[8,128], index: 2, kind: input, shape index: {}]
  %s3 = inlined_call_operand.hbm [shape: bf16[32,512], index: 3, kind: input, shape index: {}]
  %s4 = inlined_call_operand.hbm [shape: bf16[128,512], index: 4, kind: input, shape index: {}]
  %s5 = inlined_call_operand.vmem [shape: f32[1,512], index: 5, kind: input, shape index: {}]
  %s6 = inlined_call_operand.hbm [shape: f32[8,128], index: 6, kind: output, shape index: {0}]
  %s7 = inlined_call_operand.hbm [shape: f32[8,128], index: 7, kind: output, shape index: {1}]
  %8 = xla_tuple %s6, %s7
  %s9 = sld [smem:[#allocation0]]
  $region62: #{onlstm_cell_forward.1} parent=0
    _
  %s11 = ssub.s32 1, %s9
  %s12 = scalar_select 0, %s11, %s9
  $region1: #{onlstm_cell_forward.1} parent=0
    #allocation2 [shape = 'u8[4096]{0}', space=vmem, size = 0x1000, scoped, tag = 'input window, operand 0, single buffered']
    #allocation3 [shape = 's32[1]{0}', space=sflag, size = 0x4, scoped, tag = 'scoped memory for onlstm_cell_forward.1']
    #allocation4 [shape = 's32[1]{0}', space=sflag, size = 0x4, scoped, tag = 'scoped memory for onlstm_cell_forward.1']
    #allocation5 [shape = 'u8[4096]{0}', space=vmem, size = 0x1000, scoped, tag = 'input window, operand 1, single buffered']
    #allocation6 [shape = 's32[1]{0}', space=sflag, size = 0x4, scoped, tag = 'scoped memory for onlstm_cell_forward.1']
    #allocation7 [shape = 'u8[4096]{0}', space=vmem, size = 0x1000, scoped, tag = 'input window, operand 2, single buffered']
    #allocation8 [shape = 'u8[32768]{0}', space=vmem, size = 0x8000, scoped, tag = 'input window, operand 3, single buffered']
    #allocation9 [shape = 's32[1]{0}', space=sflag, size = 0x4, scoped, tag = 'scoped memory for onlstm_cell_forward.1']
    #allocation10 [shape = 'u8[131072]{0}', space=vmem, size = 0x20000, scoped, tag = 'input window, operand 4, single buffered']
    #allocation11 [shape = 'u8[4096]{0}', space=vmem, size = 0x1000, scoped, tag = 'output window, operand 0, single buffered']
    #allocation12 [shape = 'u8[4096]{0}', space=vmem, size = 0x1000, scoped, tag = 'output window, operand 1, single buffered']
    #allocation13 [shape = 's32[1]{0}', space=sflag, size = 0x4, scoped, tag = 'scoped memory for onlstm_cell_forward.1']
    %13 = vsyncpa [#allocation3], 0
    %14 = vsyncpa [#allocation6], 0
    %15 = vsyncpa [#allocation9], 0
    %16 = vsyncpa [#allocation4], 0
    %17 = vsyncpa [#allocation13], 0
    // Predicated region
    $region2: #{onlstm_cell_forward.1} parent=1 // pred_check
      _
    $region3: #{onlstm_cell_forward.1} parent=1 // pred_check_branch
      %19 = sbr.rel (0) target = $region5
    $region4: #{onlstm_cell_forward.1} parent=1 // pred_region
      %s21 = ssub.s32 128, 128
      %22 = vsyncadd [#allocation3], %s21
      %s24 = sshll.u32 [#allocation2], 4
      %s25 = int_to_ptr.vmem [resolvable:$true] %s24
      %27 = dma.hbm_to_vmem [thread:$0]  %s0, 128, %s25, [#allocation3]
    $region5: #{onlstm_cell_forward.1} parent=1 // pred_fallthru
      _
    // Predicated region
    $region6: #{onlstm_cell_forward.1} parent=1 // pred_check
      _
    $region7: #{onlstm_cell_forward.1} parent=1 // pred_check_branch
      %29 = sbr.rel (0) target = $region9
    $region8: #{onlstm_cell_forward.1} parent=1 // pred_region
      %s31 = ssub.s32 128, 128
      %32 = vsyncadd [#allocation6], %s31
      %s34 = sshll.u32 [#allocation5], 4
      %s35 = int_to_ptr.vmem [resolvable:$true] %s34
      %37 = dma.hbm_to_vmem [thread:$0]  %s1, 128, %s35, [#allocation6]
    $region9: #{onlstm_cell_forward.1} parent=1 // pred_fallthru
      _
    // Predicated region
    $region10: #{onlstm_cell_forward.1} parent=1 // pred_check
      _
    $region11: #{onlstm_cell_forward.1} parent=1 // pred_check_branch
      %39 = sbr.rel (0) target = $region13
    $region12: #{onlstm_cell_forward.1} parent=1 // pred_region
      %s41 = ssub.s32 128, 128
      %42 = vsyncadd [#allocation6], %s41
      %s44 = sshll.u32 [#allocation7], 4
      %s45 = int_to_ptr.vmem [resolvable:$true] %s44
      %47 = dma.hbm_to_vmem [thread:$0]  %s2, 128, %s45, [#allocation6]
    $region13: #{onlstm_cell_forward.1} parent=1 // pred_fallthru
      _
    // Predicated region
    $region14: #{onlstm_cell_forward.1} parent=1 // pred_check
      _
    $region15: #{onlstm_cell_forward.1} parent=1 // pred_check_branch
      %49 = sbr.rel (0) target = $region17
    $region16: #{onlstm_cell_forward.1} parent=1 // pred_region
      %s51 = ssub.s32 1024, 1024
      %52 = vsyncadd [#allocation9], %s51
      %s53 = sshll.u32 [#allocation8], 4
      %s54 = int_to_ptr.vmem [resolvable:$true] %s53
      %59 = dma.hbm_to_vmem [thread:$0]  %s3, 1024, %s54, [#allocation9], 256, 256, 16
    $region17: #{onlstm_cell_forward.1} parent=1 // pred_fallthru
      _
    // Predicated region
    $region18: #{onlstm_cell_forward.1} parent=1 // pred_check
      _
    $region19: #{onlstm_cell_forward.1} parent=1 // pred_check_branch
      %61 = sbr.rel (0) target = $region21
    $region20: #{onlstm_cell_forward.1} parent=1 // pred_region
      %s63 = ssub.s32 4096, 4096
      %64 = vsyncadd [#allocation9], %s63
      %s65 = sshll.u32 [#allocation10], 4
      %s66 = int_to_ptr.vmem [resolvable:$true] %s65
      %71 = dma.hbm_to_vmem [thread:$0]  %s4, 4096, %s66, [#allocation9], 256, 256, 16
    $region21: #{onlstm_cell_forward.1} parent=1 // pred_fallthru
      _
    // Predicated region
    $region22: #{onlstm_cell_forward.1} parent=1 // pred_check
      _
    $region23: #{onlstm_cell_forward.1} parent=1 // pred_check_branch
      %73 = sbr.rel (0) target = $region25
    $region24: #{onlstm_cell_forward.1} parent=1 // pred_region
      _
    $region25: #{onlstm_cell_forward.1} parent=1 // pred_fallthru
      _
    // Predicated region
    $region26: #{onlstm_cell_forward.1} parent=1 // pred_check
      _
    $region27: #{onlstm_cell_forward.1} parent=1 // pred_check_branch
      %75 = sbr.rel (0) target = $region29
    $region28: #{onlstm_cell_forward.1} parent=1 // pred_region
      %76 = dma.done [#allocation3], 128
    $region29: #{onlstm_cell_forward.1} parent=1 // pred_fallthru
      _
    // Predicated region
    $region30: #{onlstm_cell_forward.1} parent=1 // pred_check
      _
    $region31: #{onlstm_cell_forward.1} parent=1 // pred_check_branch
      %78 = sbr.rel (0) target = $region33
    $region32: #{onlstm_cell_forward.1} parent=1 // pred_region
      %79 = dma.done [#allocation6], 128
    $region33: #{onlstm_cell_forward.1} parent=1 // pred_fallthru
      _
    // Predicated region
    $region34: #{onlstm_cell_forward.1} parent=1 // pred_check
      _
    $region35: #{onlstm_cell_forward.1} parent=1 // pred_check_branch
      %81 = sbr.rel (0) target = $region37
    $region36: #{onlstm_cell_forward.1} parent=1 // pred_region
      %82 = dma.done [#allocation6], 128
    $region37: #{onlstm_cell_forward.1} parent=1 // pred_fallthru
      _
    // Predicated region
    $region38: #{onlstm_cell_forward.1} parent=1 // pred_check
      _
    $region39: #{onlstm_cell_forward.1} parent=1 // pred_check_branch
      %84 = sbr.rel (0) target = $region41
    $region40: #{onlstm_cell_forward.1} parent=1 // pred_region
      %85 = dma.done [#allocation9], 1024
    $region41: #{onlstm_cell_forward.1} parent=1 // pred_fallthru
      _
    // Predicated region
    $region42: #{onlstm_cell_forward.1} parent=1 // pred_check
      _
    $region43: #{onlstm_cell_forward.1} parent=1 // pred_check_branch
      %87 = sbr.rel (0) target = $region45
    $region44: #{onlstm_cell_forward.1} parent=1 // pred_region
      %88 = dma.done [#allocation9], 4096
    $region45: #{onlstm_cell_forward.1} parent=1 // pred_fallthru
      _
    %v90 = vld [vmem:[#allocation2] sm:$0xff]
    %v91 = vpack.c.bf16 %v90, %v90
    %v92 = vld [vmem:[#allocation8] sm:$0xff]
    %v93 = vld [vmem:[#allocation8 + $0x8] sm:$0xff]
    %v94 = vld [vmem:[#allocation8 + $0x10] sm:$0xff]
    %v95 = vld [vmem:[#allocation8 + $0x18] sm:$0xff]
    %v96 = vld [vmem:[#allocation8 + $0x20] sm:$0xff]
    %v97 = vld [vmem:[#allocation8 + $0x28] sm:$0xff]
    %v98 = vld [vmem:[#allocation8 + $0x30] sm:$0xff]
    %v99 = vld [vmem:[#allocation8 + $0x38] sm:$0xff]
    %v100 = vld [vmem:[#allocation5] sm:$0xff]
    %v101 = vpack.c.bf16 %v100, %v100
    %v102 = vld [vmem:[#allocation10] sm:$0xff]
    %v103 = vld [vmem:[#allocation10 + $0x8] sm:$0xff]
    %v104 = vld [vmem:[#allocation10 + $0x10] sm:$0xff]
    %v105 = vld [vmem:[#allocation10 + $0x18] sm:$0xff]
    %v106 = vld [vmem:[#allocation10 + $0x20] sm:$0xff]
    %v107 = vld [vmem:[#allocation10 + $0x28] sm:$0xff]
    %v108 = vld [vmem:[#allocation10 + $0x30] sm:$0xff]
    %v109 = vld [vmem:[#allocation10 + $0x38] sm:$0xff]
    %v110 = vld [vmem:[#allocation10 + $0x40] sm:$0xff]
    %v111 = vld [vmem:[#allocation10 + $0x48] sm:$0xff]
    %v112 = vld [vmem:[#allocation10 + $0x50] sm:$0xff]
    %v113 = vld [vmem:[#allocation10 + $0x58] sm:$0xff]
    %v114 = vld [vmem:[#allocation10 + $0x60] sm:$0xff]
    %v115 = vld [vmem:[#allocation10 + $0x68] sm:$0xff]
    %v116 = vld [vmem:[#allocation10 + $0x70] sm:$0xff]
    %v117 = vld [vmem:[#allocation10 + $0x78] sm:$0xff]
    %v118 = vld [vmem:[#allocation10 + $0x80] sm:$0xff]
    %v119 = vld [vmem:[#allocation10 + $0x88] sm:$0xff]
    %v120 = vld [vmem:[#allocation10 + $0x90] sm:$0xff]
    %v121 = vld [vmem:[#allocation10 + $0x98] sm:$0xff]
    %v122 = vld [vmem:[#allocation10 + $0xa0] sm:$0xff]
    %v123 = vld [vmem:[#allocation10 + $0xa8] sm:$0xff]
    %v124 = vld [vmem:[#allocation10 + $0xb0] sm:$0xff]
    %v125 = vld [vmem:[#allocation10 + $0xb8] sm:$0xff]
    %v126 = vld [vmem:[#allocation10 + $0xc0] sm:$0xff]
    %v127 = vld [vmem:[#allocation10 + $0xc8] sm:$0xff]
    %v128 = vld [vmem:[#allocation10 + $0xd0] sm:$0xff]
    %v129 = vld [vmem:[#allocation10 + $0xd8] sm:$0xff]
    %v130 = vld [vmem:[#allocation10 + $0xe0] sm:$0xff]
    %v131 = vld [vmem:[#allocation10 + $0xe8] sm:$0xff]
    %v132 = vld [vmem:[#allocation10 + $0xf0] sm:$0xff]
    %v133 = vld [vmem:[#allocation10 + $0xf8] sm:$0xff]
    %v166 = vunpack.c.l.b16 %v102
    %v167 = vunpack.c.h.b16 %v102
    %v168 = vunpack.c.l.b16 %v103
    %v169 = vunpack.c.h.b16 %v103
    %v170 = vunpack.c.l.b16 %v104
    %v171 = vunpack.c.h.b16 %v104
    %v172 = vunpack.c.l.b16 %v105
    %v173 = vunpack.c.h.b16 %v105
    %v174 = vunpack.c.l.b16 %v106
    %v175 = vunpack.c.h.b16 %v106
    %v176 = vunpack.c.l.b16 %v107
    %v177 = vunpack.c.h.b16 %v107
    %v178 = vunpack.c.l.b16 %v108
    %v179 = vunpack.c.h.b16 %v108
    %v180 = vunpack.c.l.b16 %v109
    %v181 = vunpack.c.h.b16 %v109
    %v182 = vunpack.c.l.b16 %v110
    %v183 = vunpack.c.h.b16 %v110
    %v184 = vunpack.c.l.b16 %v111
    %v185 = vunpack.c.h.b16 %v111
    %v186 = vunpack.c.l.b16 %v112
    %v187 = vunpack.c.h.b16 %v112
    %v188 = vunpack.c.l.b16 %v113
    %v189 = vunpack.c.h.b16 %v113
    %v190 = vunpack.c.l.b16 %v114
    %v191 = vunpack.c.h.b16 %v114
    %v192 = vunpack.c.l.b16 %v115
    %v193 = vunpack.c.h.b16 %v115
    %v194 = vunpack.c.l.b16 %v116
    %v195 = vunpack.c.h.b16 %v116
    %v196 = vunpack.c.l.b16 %v117
    %v197 = vunpack.c.h.b16 %v117
    %v198 = vunpack.c.l.b16 %v118
    %v199 = vunpack.c.h.b16 %v118
    %v200 = vunpack.c.l.b16 %v119
    %v201 = vunpack.c.h.b16 %v119
    %v202 = vunpack.c.l.b16 %v120
    %v203 = vunpack.c.h.b16 %v120
    %v204 = vunpack.c.l.b16 %v121
    %v205 = vunpack.c.h.b16 %v121
    %v206 = vunpack.c.l.b16 %v122
    %v207 = vunpack.c.h.b16 %v122
    %v208 = vunpack.c.l.b16 %v123
    %v209 = vunpack.c.h.b16 %v123
    %v210 = vunpack.c.l.b16 %v124
    %v211 = vunpack.c.h.b16 %v124
    %v212 = vunpack.c.l.b16 %v125
    %v213 = vunpack.c.h.b16 %v125
    %v214 = vunpack.c.l.b16 %v126
    %v215 = vunpack.c.h.b16 %v126
    %v216 = vunpack.c.l.b16 %v127
    %v217 = vunpack.c.h.b16 %v127
    %v218 = vunpack.c.l.b16 %v128
    %v219 = vunpack.c.h.b16 %v128
    %v220 = vunpack.c.l.b16 %v129
    %v221 = vunpack.c.h.b16 %v129
    %v222 = vunpack.c.l.b16 %v130
    %v223 = vunpack.c.h.b16 %v130
    %v224 = vunpack.c.l.b16 %v131
    %v225 = vunpack.c.h.b16 %v131
    %v226 = vunpack.c.l.b16 %v132
    %v227 = vunpack.c.h.b16 %v132
    %v228 = vunpack.c.l.b16 %v133
    %v229 = vunpack.c.h.b16 %v133
    %v230 = vpack.c.b16 %v170, %v166
    %v231 = vpack.c.b16 %v171, %v167
    %v232 = vpack.c.b16 %v172, %v168
    %v233 = vpack.c.b16 %v173, %v169
    %v234 = vpack.c.b16 %v178, %v174
    %v235 = vpack.c.b16 %v179, %v175
    %v236 = vpack.c.b16 %v180, %v176
    %v237 = vpack.c.b16 %v181, %v177
    %v238 = vpack.c.b16 %v186, %v182
    %v239 = vpack.c.b16 %v187, %v183
    %v240 = vpack.c.b16 %v188, %v184
    %v241 = vpack.c.b16 %v189, %v185
    %v242 = vpack.c.b16 %v194, %v190
    %v243 = vpack.c.b16 %v195, %v191
    %v244 = vpack.c.b16 %v196, %v192
    %v245 = vpack.c.b16 %v197, %v193
    %v246 = vpack.c.b16 %v202, %v198
    %v247 = vpack.c.b16 %v203, %v199
    %v248 = vpack.c.b16 %v204, %v200
    %v249 = vpack.c.b16 %v205, %v201
    %v250 = vpack.c.b16 %v210, %v206
    %v251 = vpack.c.b16 %v211, %v207
    %v252 = vpack.c.b16 %v212, %v208
    %v253 = vpack.c.b16 %v213, %v209
    %v254 = vpack.c.b16 %v218, %v214
    %v255 = vpack.c.b16 %v219, %v215
    %v256 = vpack.c.b16 %v220, %v216
    %v257 = vpack.c.b16 %v221, %v217
    %v258 = vpack.c.b16 %v226, %v222
    %v259 = vpack.c.b16 %v227, %v223
    %v260 = vpack.c.b16 %v228, %v224
    %v261 = vpack.c.b16 %v229, %v225
    %294 = vmatprep.subr.bf16.mxu0 %v231
    %295 = vmatpush1.bf16.msra.mxu0 %v230
    %296 = vmatprep.subr.bf16.mxu0 %v235
    %297 = vmatpush1.bf16.msra.mxu0 %v234
    %298 = vmatprep.subr.bf16.mxu0 %v239
    %299 = vmatpush1.bf16.msra.mxu0 %v238
    %300 = vmatprep.subr.bf16.mxu0 %v243
    %301 = vmatpush1.bf16.msra.mxu0 %v242
    %302 = vmatprep.subr.bf16.mxu0 %v247
    %303 = vmatpush1.bf16.msra.mxu0 %v246
    %304 = vmatprep.subr.bf16.mxu0 %v251
    %305 = vmatpush1.bf16.msra.mxu0 %v250
    %306 = vmatprep.subr.bf16.mxu0 %v255
    %307 = vmatpush1.bf16.msra.mxu0 %v254
    %308 = vmatprep.subr.bf16.mxu0 %v259
    %309 = vmatpush1.bf16.msra.mxu0 %v258
    %310 = vmatprep.subr.bf16.mxu0 0
    %311 = vmatpush1.bf16.msra.mxu0 0
    %312 = vmatprep.subr.bf16.mxu0 0
    %313 = vmatpush1.bf16.msra.mxu0 0
    %314 = vmatprep.subr.bf16.mxu0 0
    %315 = vmatpush1.bf16.msra.mxu0 0
    %316 = vmatprep.subr.bf16.mxu0 0
    %317 = vmatpush1.bf16.msra.mxu0 0
    %318 = vmatprep.subr.bf16.mxu0 0
    %319 = vmatpush1.bf16.msra.mxu0 0
    %320 = vmatprep.subr.bf16.mxu0 0
    %321 = vmatpush1.bf16.msra.mxu0 0
    %322 = vmatprep.subr.bf16.mxu0 0
    %323 = vmatpush1.bf16.msra.mxu0 0
    %324 = vmatprep.subr.bf16.mxu0 0
    %325 = vmatpush1.bf16.msra.mxu0 0
    %326 = vmatprep.mubr.bf16.mxu0 0
    %327 = vmatmul.mubr.bf16.gmra.mrb[0].mxu0 %v101
    %v328 = vpop.f32.mrb[0].mxu0
    %v329 = vadd.f32 0.0, %v328
    %v330 = vpop.f32.mrb[0].mxu0
    %v331 = vadd.f32 0.0, %v330
    %v332 = vpop.f32.mrb[0].mxu0
    %v333 = vpop.f32.mrb[0].mxu0
    %334 = vdwg.mxu0
    %335 = vmatprep.subr.bf16.mxu0 %v233
    %336 = vmatpush1.bf16.msra.mxu0 %v232
    %337 = vmatprep.subr.bf16.mxu0 %v237
    %338 = vmatpush1.bf16.msra.mxu0 %v236
    %339 = vmatprep.subr.bf16.mxu0 %v241
    %340 = vmatpush1.bf16.msra.mxu0 %v240
    %341 = vmatprep.subr.bf16.mxu0 %v245
    %342 = vmatpush1.bf16.msra.mxu0 %v244
    %343 = vmatprep.subr.bf16.mxu0 %v249
    %344 = vmatpush1.bf16.msra.mxu0 %v248
    %345 = vmatprep.subr.bf16.mxu0 %v253
    %346 = vmatpush1.bf16.msra.mxu0 %v252
    %347 = vmatprep.subr.bf16.mxu0 %v257
    %348 = vmatpush1.bf16.msra.mxu0 %v256
    %349 = vmatprep.subr.bf16.mxu0 %v261
    %350 = vmatpush1.bf16.msra.mxu0 %v260
    %351 = vmatprep.subr.bf16.mxu0 0
    %352 = vmatpush1.bf16.msra.mxu0 0
    %353 = vmatprep.subr.bf16.mxu0 0
    %354 = vmatpush1.bf16.msra.mxu0 0
    %355 = vmatprep.subr.bf16.mxu0 0
    %356 = vmatpush1.bf16.msra.mxu0 0
    %357 = vmatprep.subr.bf16.mxu0 0
    %358 = vmatpush1.bf16.msra.mxu0 0
    %359 = vmatprep.subr.bf16.mxu0 0
    %360 = vmatpush1.bf16.msra.mxu0 0
    %361 = vmatprep.subr.bf16.mxu0 0
    %362 = vmatpush1.bf16.msra.mxu0 0
    %363 = vmatprep.subr.bf16.mxu0 0
    %364 = vmatpush1.bf16.msra.mxu0 0
    %365 = vmatprep.subr.bf16.mxu0 0
    %366 = vmatpush1.bf16.msra.mxu0 0
    %367 = vmatprep.mubr.bf16.mxu0 0
    %368 = vmatmul.mubr.bf16.gmra.mrb[0].mxu0 %v101
    %v369 = vpop.f32.mrb[0].mxu0
    %v370 = vadd.f32 0.0, %v369
    %v371 = vpop.f32.mrb[0].mxu0
    %v372 = vadd.f32 0.0, %v371
    %v373 = vpop.f32.mrb[0].mxu0
    %v374 = vpop.f32.mrb[0].mxu0
    %375 = vdwg.mxu0
    %v384 = vunpack.c.l.b16 %v92
    %v385 = vunpack.c.h.b16 %v92
    %v386 = vunpack.c.l.b16 %v93
    %v387 = vunpack.c.h.b16 %v93
    %v388 = vunpack.c.l.b16 %v94
    %v389 = vunpack.c.h.b16 %v94
    %v390 = vunpack.c.l.b16 %v95
    %v391 = vunpack.c.h.b16 %v95
    %v392 = vunpack.c.l.b16 %v96
    %v393 = vunpack.c.h.b16 %v96
    %v394 = vunpack.c.l.b16 %v97
    %v395 = vunpack.c.h.b16 %v97
    %v396 = vunpack.c.l.b16 %v98
    %v397 = vunpack.c.h.b16 %v98
    %v398 = vunpack.c.l.b16 %v99
    %v399 = vunpack.c.h.b16 %v99
    %v400 = vpack.c.b16 %v388, %v384
    %v401 = vpack.c.b16 %v389, %v385
    %v402 = vpack.c.b16 %v390, %v386
    %v403 = vpack.c.b16 %v391, %v387
    %v404 = vpack.c.b16 %v396, %v392
    %v405 = vpack.c.b16 %v397, %v393
    %v406 = vpack.c.b16 %v398, %v394
    %v407 = vpack.c.b16 %v399, %v395
    %vm416 = vcmask 261120
    %v418 = vsel %vm416, %v91, 0
    %420 = vmatprep.subr.bf16.mxu0 %v401
    %421 = vmatpush1.bf16.msra.mxu0 %v400
    %422 = vmatprep.subr.bf16.mxu0 %v405
    %423 = vmatpush1.bf16.msra.mxu0 %v404
    %424 = vmatprep.subr.bf16.mxu0 0
    %425 = vmatpush1.bf16.msra.mxu0 0
    %426 = vmatprep.subr.bf16.mxu0 0
    %427 = vmatpush1.bf16.msra.mxu0 0
    %428 = vmatprep.subr.bf16.mxu0 0
    %429 = vmatpush1.bf16.msra.mxu0 0
    %430 = vmatprep.subr.bf16.mxu0 0
    %431 = vmatpush1.bf16.msra.mxu0 0
    %432 = vmatprep.subr.bf16.mxu0 0
    %433 = vmatpush1.bf16.msra.mxu0 0
    %434 = vmatprep.subr.bf16.mxu0 0
    %435 = vmatpush1.bf16.msra.mxu0 0
    %436 = vmatprep.subr.bf16.mxu0 0
    %437 = vmatpush1.bf16.msra.mxu0 0
    %438 = vmatprep.subr.bf16.mxu0 0
    %439 = vmatpush1.bf16.msra.mxu0 0
    %440 = vmatprep.subr.bf16.mxu0 0
    %441 = vmatpush1.bf16.msra.mxu0 0
    %442 = vmatprep.subr.bf16.mxu0 0
    %443 = vmatpush1.bf16.msra.mxu0 0
    %444 = vmatprep.subr.bf16.mxu0 0
    %445 = vmatpush1.bf16.msra.mxu0 0
    %446 = vmatprep.subr.bf16.mxu0 0
    %447 = vmatpush1.bf16.msra.mxu0 0
    %448 = vmatprep.subr.bf16.mxu0 0
    %449 = vmatpush1.bf16.msra.mxu0 0
    %450 = vmatprep.subr.bf16.mxu0 0
    %451 = vmatpush1.bf16.msra.mxu0 0
    %452 = vmatprep.mubr.bf16.mxu0 0
    %453 = vmatmul.mubr.bf16.gmra.mrb[0].mxu0 %v418
    %v454 = vpop.f32.mrb[0].mxu0
    %v455 = vadd.f32 %v329, %v454
    %v456 = vpop.f32.mrb[0].mxu0
    %v457 = vadd.f32 %v331, %v456
    %v458 = vpop.f32.mrb[0].mxu0
    %v459 = vpop.f32.mrb[0].mxu0
    %460 = vdwg.mxu0
    %461 = vmatprep.subr.bf16.mxu0 %v403
    %462 = vmatpush1.bf16.msra.mxu0 %v402
    %463 = vmatprep.subr.bf16.mxu0 %v407
    %464 = vmatpush1.bf16.msra.mxu0 %v406
    %465 = vmatprep.subr.bf16.mxu0 0
    %466 = vmatpush1.bf16.msra.mxu0 0
    %467 = vmatprep.subr.bf16.mxu0 0
    %468 = vmatpush1.bf16.msra.mxu0 0
    %469 = vmatprep.subr.bf16.mxu0 0
    %470 = vmatpush1.bf16.msra.mxu0 0
    %471 = vmatprep.subr.bf16.mxu0 0
    %472 = vmatpush1.bf16.msra.mxu0 0
    %473 = vmatprep.subr.bf16.mxu0 0
    %474 = vmatpush1.bf16.msra.mxu0 0
    %475 = vmatprep.subr.bf16.mxu0 0
    %476 = vmatpush1.bf16.msra.mxu0 0
    %477 = vmatprep.subr.bf16.mxu0 0
    %478 = vmatpush1.bf16.msra.mxu0 0
    %479 = vmatprep.subr.bf16.mxu0 0
    %480 = vmatpush1.bf16.msra.mxu0 0
    %481 = vmatprep.subr.bf16.mxu0 0
    %482 = vmatpush1.bf16.msra.mxu0 0
    %483 = vmatprep.subr.bf16.mxu0 0
    %484 = vmatpush1.bf16.msra.mxu0 0
    %485 = vmatprep.subr.bf16.mxu0 0
    %486 = vmatpush1.bf16.msra.mxu0 0
    %487 = vmatprep.subr.bf16.mxu0 0
    %488 = vmatpush1.bf16.msra.mxu0 0
    %489 = vmatprep.subr.bf16.mxu0 0
    %490 = vmatpush1.bf16.msra.mxu0 0
    %491 = vmatprep.subr.bf16.mxu0 0
    %492 = vmatpush1.bf16.msra.mxu0 0
    %493 = vmatprep.mubr.bf16.mxu0 0
    %494 = vmatmul.mubr.bf16.gmra.mrb[0].mxu0 %v418
    %v495 = vpop.f32.mrb[0].mxu0
    %v496 = vadd.f32 %v370, %v495
    %v497 = vpop.f32.mrb[0].mxu0
    %v498 = vadd.f32 %v372, %v497
    %v499 = vpop.f32.mrb[0].mxu0
    %v500 = vpop.f32.mrb[0].mxu0
    %501 = vdwg.mxu0
    %v502 = vld [vmem:[%s5] sm:$0xf]
    %v504 = vlaneseq
    %v505 = vshrl.u32 %v504, 7
    %v506 = vsub.s32 0, %v505
    %v507 = vrot.slane %v502, %v506
    %v508 = vlaneseq
    %v509 = vshrl.u32 %v508, 7
    %v510 = vsub.s32 1, %v509
    %v511 = vrot.slane %v502, %v510
    %v512 = vlaneseq
    %v513 = vshrl.u32 %v512, 7
    %v514 = vsub.s32 2, %v513
    %v515 = vrot.slane %v502, %v514
    %v516 = vlaneseq
    %v517 = vshrl.u32 %v516, 7
    %v518 = vsub.s32 3, %v517
    %v519 = vrot.slane %v502, %v518
    %v524 = vadd.f32 %v455, %v507
    %v525 = vadd.f32 %v457, %v511
    %v526 = vadd.f32 %v496, %v515
    %v527 = vadd.f32 %v498, %v519
    %v528 = vxor.u32 %v524, 2147483648
    %v529 = vmul.f32 %v528, 1.442695
    %v530 = vpow.pop %v529
    %v531 = vadd.f32 %v530, 1.0
    %v532 = vrcp.pop %v531
    %v533 = vmul.f32 1.0, %v532
    %v534 = vtanh.pop %v525
    %v535 = vxor.u32 %v526, 2147483648
    %v536 = vxor.u32 %v527, 2147483648
    %v537 = vmul.f32 %v535, 1.442695
    %v538 = vpow.pop %v537
    %v539 = vmul.f32 %v536, 1.442695
    %v540 = vpow.pop %v539
    %v541 = vadd.f32 %v538, 1.0
    %v542 = vadd.f32 %v540, 1.0
    %v543 = vrcp.pop %v541
    %v544 = vmul.f32 1.0, %v543
    %v545 = vrcp.pop %v542
    %v546 = vmul.f32 1.0, %v545
    %v547 = vld [vmem:[#allocation7] sm:$0xff]
    %v548 = vmul.f32 %v546, %v547
    %v549 = vmul.f32 %v544, %v534
    %v550 = vadd.f32 %v548, %v549
    %v551 = vtanh.pop %v550
    %v552 = vmul.f32 %v533, %v551
    %553 = vst [vmem:[#allocation11] sm:$0xff] %v552
    %554 = vst [vmem:[#allocation12] sm:$0xff] %v550
    // Predicated region
    $region46: #{onlstm_cell_forward.1} parent=1 // pred_check
      _
    $region47: #{onlstm_cell_forward.1} parent=1 // pred_check_branch
      %556 = sbr.rel (0) target = $region49
    $region48: #{onlstm_cell_forward.1} parent=1 // pred_region
      %s558 = ssub.s32 128, 128
      %559 = vsyncadd [#allocation4], %s558
      %s561 = sshll.u32 [#allocation11], 4
      %s562 = int_to_ptr.vmem [resolvable:$true] %s561
      %564 = dma.vmem_to_hbm [thread:$0]  %s562, 128, %s6, [#allocation4]
    $region49: #{onlstm_cell_forward.1} parent=1 // pred_fallthru
      _
    // Predicated region
    $region50: #{onlstm_cell_forward.1} parent=1 // pred_check
      _
    $region51: #{onlstm_cell_forward.1} parent=1 // pred_check_branch
      %566 = sbr.rel (0) target = $region53
    $region52: #{onlstm_cell_forward.1} parent=1 // pred_region
      %s568 = ssub.s32 128, 128
      %569 = vsyncadd [#allocation13], %s568
      %s571 = sshll.u32 [#allocation12], 4
      %s572 = int_to_ptr.vmem [resolvable:$true] %s571
      %574 = dma.vmem_to_hbm [thread:$0]  %s572, 128, %s7, [#allocation13]
    $region53: #{onlstm_cell_forward.1} parent=1 // pred_fallthru
      _
    // Predicated region
    $region54: #{onlstm_cell_forward.1} parent=1 // pred_check
      _
    $region55: #{onlstm_cell_forward.1} parent=1 // pred_check_branch
      %576 = sbr.rel (0) target = $region57
    $region56: #{onlstm_cell_forward.1} parent=1 // pred_region
      %577 = dma.done [#allocation4], 128
    $region57: #{onlstm_cell_forward.1} parent=1 // pred_fallthru
      _
    // Predicated region
    $region58: #{onlstm_cell_forward.1} parent=1 // pred_check
      _
    $region59: #{onlstm_cell_forward.1} parent=1 // pred_check_branch
      %579 = sbr.rel (0) target = $region61
    $region60: #{onlstm_cell_forward.1} parent=1 // pred_region
      %580 = dma.done [#allocation13], 128
    $region61: #{onlstm_cell_forward.1} parent=1 // pred_fallthru
      _
    %581 = vsyncpa [#allocation3], 1
    %582 = vsyncpa [#allocation6], 1
    %583 = vsyncpa [#allocation9], 1
    %584 = vsyncpa [#allocation4], 1
    %585 = vsyncpa [#allocation13], 1

</llo_original>
